<compile_context>
chip_gen: v6e
topology: v6e:2x2x1
jax: 0.10.0
libtpu: 0.0.40
codegen_flags: <defaults>
</compile_context>

<pallas_src>
from functools import partial

import jax
import jax.numpy as jnp
from jax.experimental import pallas as pl
from jax.experimental.pallas import tpu as pltpu


def _round_up(x, m):
    return ((x + m - 1) // m) * m


def _spatial_attention_kernel(w_ref, tgt_ref, ctx_ref, wc_ref, attn_ref, *,
                              compute_dtype, approx_recip):
    # Per-step blocks: w (idf, cdf), tgt (1, idf, tq), ctx (1, cdf, sourceL).
    w = w_ref[...].astype(compute_dtype)        # (idf, cdf)
    ctx = ctx_ref[0].astype(compute_dtype)      # (cdf, sourceL)
    tgt = tgt_ref[0].astype(compute_dtype)      # (idf, tq)

    # conv1x1 projection: sourceT = W @ context -> (idf, sourceL), f32 accum.
    # Tiny; recomputed per queryL tile so the q axis stays "parallel".
    sourceT = jnp.dot(w, ctx, preferred_element_type=jnp.float32)
    sT = sourceT.astype(compute_dtype)          # (idf, sourceL) for wc matmul
    sTt = sourceT.T.astype(compute_dtype)       # (sourceL, idf) tiny transpose

    # Scores directly in (sourceL, tq) orientation — queryL stays lane-major.
    s = jnp.dot(sTt, tgt, preferred_element_type=jnp.float32)   # (sourceL, tq)

    # TODO(synk): optional self.mask (masked_fill with -inf before softmax) not
    # implemented; module default is mask=None.

    # Softmax over sourceL (axis 0, small sublane axis), kept in f32.
    m = jnp.max(s, axis=0, keepdims=True)
    e = jnp.exp(s - m)
    denom = jnp.sum(e, axis=0, keepdims=True)
    p = e * pl.reciprocal(denom, approx=approx_recip)            # (sourceL, tq)

    attn_ref[0] = p.astype(attn_ref.dtype)

    # weightedContext = sourceT @ attn -> (idf, tq); lane-dense output store.
    wc = jnp.dot(sT, p.astype(compute_dtype),
                 preferred_element_type=jnp.float32)
    wc_ref[0] = wc.astype(wc_ref.dtype)


def spatial_attention(inp, context, weight, *,
                      compute_dtype=jnp.bfloat16,
                      approx_recip=True,
                      max_tq=512):
    """
    inp     : (B, idf, ih, iw)   float32
    context : (B, cdf, sourceL)  float32
    weight  : (idf, cdf)         float32  (conv1x1 weight squeezed)
    returns (weightedContext (B, idf, queryL), attn (B, sourceL, ih, iw))
    """
    B, idf, ih, iw = inp.shape
    Bc, cdf, sourceL = context.shape
    assert Bc == B
    queryL = ih * iw

    # queryL tile: multiple of 128 (lane-dense outputs), capped at max_tq.
    tq = min(_round_up(max_tq, 128), _round_up(queryL, 128))
    qpad = _round_up(queryL, tq)
    nq = qpad // tq

    target = inp.reshape(B, idf, queryL)
    if qpad != queryL:
        # Zero-pad queryL; padded columns are independent under the per-column
        # softmax and are sliced off after the kernel.
        target = jnp.pad(target, ((0, 0), (0, 0), (0, qpad - queryL)))

    kernel = partial(_spatial_attention_kernel,
                     compute_dtype=compute_dtype,
                     approx_recip=approx_recip)

    # Explicit scoped-VMEM limit: double-buffered HBM-side blocks (f32) plus
    # generous headroom, clamped under v7x's 64 MiB physical VMEM.
    blk_bytes = 4 * (idf * cdf + cdf * sourceL + 2 * idf * tq + sourceL * tq)
    vmem_limit = int(min(64 * 1024 * 1024, max(32 * 1024 * 1024, 4 * blk_bytes)))

    wc, attn = pl.pallas_call(
        kernel,
        out_shape=(
            jax.ShapeDtypeStruct((B, idf, qpad), inp.dtype),
            jax.ShapeDtypeStruct((B, sourceL, qpad), inp.dtype),
        ),
        grid=(B, nq),
        in_specs=[
            pl.BlockSpec((idf, cdf), lambda b, q: (0, 0)),
            pl.BlockSpec((1, idf, tq), lambda b, q: (b, 0, q)),
            pl.BlockSpec((1, cdf, sourceL), lambda b, q: (b, 0, 0)),
        ],
        out_specs=(
            pl.BlockSpec((1, idf, tq), lambda b, q: (b, 0, q)),
            pl.BlockSpec((1, sourceL, tq), lambda b, q: (b, 0, q)),
        ),
        compiler_params=pltpu.CompilerParams(
            dimension_semantics=("parallel", "parallel"),
            vmem_limit_bytes=vmem_limit),
    )(weight, target, context)

    wc = wc[:, :, :queryL]
    attn = attn[:, :, :queryL].reshape(B, sourceL, ih, iw)
    return wc, attn


def _reference(inp, context, weight, compute_dtype=jnp.float32):
    """Pure-JAX reference matching the PyTorch forward (optionally with the
    same bf16 operand casts the kernel's performance path uses)."""
    B, idf, ih, iw = inp.shape
    _, cdf, sourceL = context.shape
    queryL = ih * iw
    target = inp.reshape(B, idf, queryL).astype(compute_dtype)    # (B, idf, qL)
    w = weight.astype(compute_dtype)
    ctx = context.astype(compute_dtype)
    sourceT = jnp.einsum("oc,bcl->bol", w, ctx,
                         preferred_element_type=jnp.float32)      # (B, idf, sL)
    sT = sourceT.astype(compute_dtype)
    s = jnp.einsum("bil,biq->blq", sT, target,
                   preferred_element_type=jnp.float32)            # (B, sL, qL)
    p = jax.nn.softmax(s, axis=1)                                 # over sourceL
    wc = jnp.einsum("bil,blq->biq", sT, p.astype(compute_dtype),
                    preferred_element_type=jnp.float32)           # (B, idf, qL)
    return wc.astype(inp.dtype), p.reshape(B, sourceL, ih, iw).astype(inp.dtype)


if __name__ == "__main__":
    # Small shapes consistent with the forward pass.
    B, idf, cdf = 2, 32, 16
    ih, iw = 8, 8            # queryL = 64 (padded to 128 inside the wrapper)
    sourceL = 8

    key = jax.random.PRNGKey(0)
    k1, k2, k3 = jax.random.split(key, 3)
    inp = jax.random.normal(k1, (B, idf, ih, iw), dtype=jnp.float32)
    context = jax.random.normal(k2, (B, cdf, sourceL), dtype=jnp.float32)
    # Conv2d weight (idf, cdf, 1, 1) squeezed, scaled init.
    weight = jax.random.normal(k3, (idf, cdf), dtype=jnp.float32) * (1.0 / jnp.sqrt(cdf))

    # 1) Exact f32 path: tight check against the f32 reference.
    wc32, attn32 = spatial_attention(inp, context, weight,
                                     compute_dtype=jnp.float32,
                                     approx_recip=False)
    wc32 = jax.block_until_ready(wc32)
    attn32 = jax.block_until_ready(attn32)
    wc_ref, attn_ref = _reference(inp, context, weight)
    assert wc32.shape == (B, idf, ih * iw)
    assert attn32.shape == (B, sourceL, ih, iw)
    assert jnp.allclose(wc32, wc_ref, atol=1e-4, rtol=1e-4)
    assert jnp.allclose(attn32, attn_ref, atol=1e-4, rtol=1e-4)

    # 2) Performance path (bf16 MXU operands + approx reciprocal), checked
    #    against a reference that applies the same bf16 operand casts.
    wc_b, attn_b = spatial_attention(inp, context, weight,
                                     compute_dtype=jnp.bfloat16,
                                     approx_recip=True)
    wc_b = jax.block_until_ready(wc_b)
    attn_b = jax.block_until_ready(attn_b)
    wc_rb, attn_rb = _reference(inp, context, weight, compute_dtype=jnp.bfloat16)
    assert jnp.allclose(wc_b, wc_rb, atol=2e-2, rtol=2e-2)
    assert jnp.allclose(attn_b, attn_rb, atol=1e-2, rtol=1e-2)

    print("KERNEL_OK")
</pallas_src>

<mosaic_0001>
module attributes {stable_mosaic.version = 11 : i64} {
  func.func @_spatial_attention_kernel(%arg0: i32, %arg1: i32, %arg2: memref<32x16xf32, #tpu.memory_space<vmem>>, %arg3: memref<1x32x128xf32, #tpu.memory_space<vmem>>, %arg4: memref<1x16x8xf32, #tpu.memory_space<vmem>>, %arg5: memref<1x32x128xf32, #tpu.memory_space<vmem>>, %arg6: memref<1x8x128xf32, #tpu.memory_space<vmem>>) attributes {dimension_semantics = [#tpu.dimension_semantics<parallel>, #tpu.dimension_semantics<parallel>], iteration_bounds = array<i64: 2, 1>, scalar_prefetch = 0 : i64, scratch_operands = 0 : i64, tpu.core_type = #tpu.core_type<tc>, window_params = [{pipeline_mode = #tpu.pipeline_mode<synchronous>, transform_indices = @transform_0, window_bounds = array<i64: 32, 16>}, {transform_indices = @transform_1, window_bounds = array<i64: 1, 32, 128>}, {transform_indices = @transform_2, window_bounds = array<i64: 1, 16, 8>}, {transform_indices = @transform_3, window_bounds = array<i64: 1, 32, 128>}, {transform_indices = @transform_4, window_bounds = array<i64: 1, 8, 128>}]} {
    %c0 = arith.constant 0 : index
    %c0_0 = arith.constant 0 : index
    %0 = vector.load %arg2[%c0, %c0_0] : memref<32x16xf32, #tpu.memory_space<vmem>>, vector<32x16xf32>
    %c0_1 = arith.constant 0 : index
    %c0_2 = arith.constant 0 : index
    %c0_3 = arith.constant 0 : index
    %1 = vector.load %arg4[%c0_1, %c0_2, %c0_3] : memref<1x16x8xf32, #tpu.memory_space<vmem>>, vector<1x16x8xf32>
    %2 = vector.shape_cast %1 : vector<1x16x8xf32> to vector<16x8xf32>
    %c0_4 = arith.constant 0 : index
    %c0_5 = arith.constant 0 : index
    %c0_6 = arith.constant 0 : index
    %3 = vector.load %arg3[%c0_4, %c0_5, %c0_6] : memref<1x32x128xf32, #tpu.memory_space<vmem>>, vector<1x32x128xf32>
    %4 = vector.shape_cast %3 : vector<1x32x128xf32> to vector<32x128xf32>
    %cst = arith.constant dense<0.000000e+00> : vector<32x8xf32>
    %5 = tpu.matmul %0, %2, %cst {dimension_numbers = #tpu.dot_dimension_numbers<[1], [0], [0], [1], [0, 0, 1, 1], [], []>} : vector<32x16xf32>, vector<16x8xf32>, vector<32x8xf32> -> vector<32x8xf32>
    %6 = tpu.transpose %5, [1, 0] : vector<32x8xf32> -> vector<8x32xf32>
    %cst_7 = arith.constant dense<0.000000e+00> : vector<8x128xf32>
    %7 = tpu.matmul %6, %4, %cst_7 {dimension_numbers = #tpu.dot_dimension_numbers<[1], [0], [0], [1], [0, 0, 1, 1], [], []>} : vector<8x32xf32>, vector<32x128xf32>, vector<8x128xf32> -> vector<8x128xf32>
    %cst_8 = arith.constant dense<0xFF800000> : vector<128xf32>
    %8 = vector.multi_reduction <maximumf>, %7, %cst_8 [0] : vector<8x128xf32> to vector<128xf32>
    %9 = vector.shape_cast %8 : vector<128xf32> to vector<1x128xf32>
    %10 = vector.broadcast %9 : vector<1x128xf32> to vector<8x128xf32>
    %11 = arith.subf %7, %10 : vector<8x128xf32>
    %12 = math.exp %11 : vector<8x128xf32>
    %cst_9 = arith.constant dense<0.000000e+00> : vector<128xf32>
    %13 = vector.multi_reduction <add>, %12, %cst_9 [0] : vector<8x128xf32> to vector<128xf32>
    %14 = vector.shape_cast %13 : vector<128xf32> to vector<1x128xf32>
    %15 = tpu.reciprocal %14 : vector<1x128xf32> -> vector<1x128xf32>
    %16 = vector.broadcast %15 : vector<1x128xf32> to vector<8x128xf32>
    %17 = arith.mulf %12, %16 : vector<8x128xf32>
    %c0_10 = arith.constant 0 : index
    %c0_11 = arith.constant 0 : index
    %c0_12 = arith.constant 0 : index
    %18 = vector.load %arg6[%c0_10, %c0_11, %c0_12] : memref<1x8x128xf32, #tpu.memory_space<vmem>>, vector<1x8x128xf32>
    %19 = vector.shape_cast %18 : vector<1x8x128xf32> to vector<8x128xf32>
    %20 = vector.shape_cast %17 : vector<8x128xf32> to vector<1x8x128xf32>
    tpu.vector_store %arg6[%c0_10, %c0_11, %c0_12], %20 {strides = array<i32>} : memref<1x8x128xf32, #tpu.memory_space<vmem>>, vector<1x8x128xf32>,
    %cst_13 = arith.constant dense<0.000000e+00> : vector<32x128xf32>
    %21 = tpu.matmul %5, %17, %cst_13 {dimension_numbers = #tpu.dot_dimension_numbers<[1], [0], [0], [1], [0, 0, 1, 1], [], []>} : vector<32x8xf32>, vector<8x128xf32>, vector<32x128xf32> -> vector<32x128xf32>
    %c0_14 = arith.constant 0 : index
    %c0_15 = arith.constant 0 : index
    %c0_16 = arith.constant 0 : index
    %22 = vector.load %arg5[%c0_14, %c0_15, %c0_16] : memref<1x32x128xf32, #tpu.memory_space<vmem>>, vector<1x32x128xf32>
    %23 = vector.shape_cast %22 : vector<1x32x128xf32> to vector<32x128xf32>
    %24 = vector.shape_cast %21 : vector<32x128xf32> to vector<1x32x128xf32>
    tpu.vector_store %arg5[%c0_14, %c0_15, %c0_16], %24 {strides = array<i32>} : memref<1x32x128xf32, #tpu.memory_space<vmem>>, vector<1x32x128xf32>,
    return
  }
  func.func @transform_0(%arg0: i32, %arg1: i32) -> (i32, i32) {
    %c0_i32 = arith.constant 0 : i32
    %c0_i32_0 = arith.constant 0 : i32
    %c0_i32_1 = arith.constant 0 : i32
    return %c0_i32, %c0_i32_0 : i32, i32
  }
  func.func @transform_1(%arg0: i32, %arg1: i32) -> (i32, i32, i32) {
    %c0_i32 = arith.constant 0 : i32
    %c0_i32_0 = arith.constant 0 : i32
    return %arg0, %c0_i32, %arg1 : i32, i32, i32
  }
  func.func @transform_2(%arg0: i32, %arg1: i32) -> (i32, i32, i32) {
    %c0_i32 = arith.constant 0 : i32
    %c0_i32_0 = arith.constant 0 : i32
    %c0_i32_1 = arith.constant 0 : i32
    return %arg0, %c0_i32, %c0_i32_0 : i32, i32, i32
  }
  func.func @transform_3(%arg0: i32, %arg1: i32) -> (i32, i32, i32) {
    %c0_i32 = arith.constant 0 : i32
    %c0_i32_0 = arith.constant 0 : i32
    return %arg0, %c0_i32, %arg1 : i32, i32, i32
  }
  func.func @transform_4(%arg0: i32, %arg1: i32) -> (i32, i32, i32) {
    %c0_i32 = arith.constant 0 : i32
    %c0_i32_0 = arith.constant 0 : i32
    return %arg0, %c0_i32, %arg1 : i32, i32, i32
  }
}

</mosaic_0001>

<llo_original>
// kernel: tpu_custom_call.1
$region0: #{tpu_custom_call.1}
  #allocation0 [shape = 'u32[]', space=smem, size = 0x4, offset = 0x4, fixed_abs, tag = 'smem constant byte address 0x4 - core index']
  #allocation1 [shape = 'u32[144,128]{1,0:T(1,128)}', space=vmem, size = 0x12000, scoped, tag = 'internal scratch']
  %s0 = inlined_call_operand.vmem [shape: f32[32,16], index: 0, kind: input, shape index: {}]
  %s1 = inlined_call_operand.vmem [shape: f32[2,32,128], index: 1, kind: input, shape index: {}]
  %s2 = inlined_call_operand.vmem [shape: f32[2,16,8], index: 2, kind: input, shape index: {}]
  %s3 = inlined_call_operand.hbm [shape: f32[2,32,128], index: 3, kind: output, shape index: {0}]
  %s4 = inlined_call_operand.hbm [shape: f32[2,8,128], index: 4, kind: output, shape index: {1}]
  %5 = xla_tuple %s3, %s4
  %s6 = sld [smem:[#allocation0]]
  $region53: #{tpu_custom_call.1} parent=0
    _
  %s8 = ssub.s32 1, %s6
  %s9 = scalar_select 0, %s8, %s6
  $region1: #{tpu_custom_call.1} parent=0
    #allocation2 [shape = 'u8[32768]{0}', space=vmem, size = 0x8000, scoped, tag = 'output window, operand 0']
    #allocation3 [shape = 's32[2]{0}', space=sflag, size = 0x8, scoped, tag = 'scoped memory for tpu_custom_call.1']
    #allocation4 [shape = 'u8[8192]{0}', space=vmem, size = 0x2000, scoped, tag = 'output window, operand 1']
    #allocation5 [shape = 's32[2]{0}', space=sflag, size = 0x8, scoped, tag = 'scoped memory for tpu_custom_call.1']
    %10 = vsyncpa [#allocation3], 0
    %s11 = scalar_lea.sflag [#allocation3], 1
    %12 = vsyncpa %s11, 0
    %13 = vsyncpa [#allocation5], 0
    %s14 = scalar_lea.sflag [#allocation5], 1
    %15 = vsyncpa %s14, 0
    loop: start=0, step=1, limit=4
    $region2: #{tpu_custom_call.1} parent=1 // loop_pre_header
      _
    $region3: #{tpu_custom_call.1} parent=1 // loop_header
      %s17 = sphi 0, %s21
      %p18 = scmp.ge.s32.totalorder %s17, 4
      %s24 = sphi 0, %s36
      %s25 = sphi 0, %s32
      %s26 = sphi 0, %s24
      %s27 = sphi 0, %s25
      %s28 = sphi 0, %s26
      %s29 = sphi 0, %s27
      %s37 = sphi 0, %s37
      %s39 = sphi 0, %s37
      %s40 = sphi 0, %s39
      %s54 = sphi 0, %s40
      %s62 = sphi 0, %s64
      %s65 = sphi 0, %s62
      %s66 = sphi 0, %s65
      %s82 = sphi 0, %s66
      %s88 = sphi 0, %s90
      %s91 = sphi 0, %s88
      %s92 = sphi 0, %s91
      %s108 = sphi 0, %s92
      %s116 = sphi 0, %s118
      %s119 = sphi 0, %s116
      %s120 = sphi 0, %s119
      %s136 = sphi 0, %s120
      %s144 = sphi 0, %s146
      %s147 = sphi 0, %s144
      %s148 = sphi 0, %s147
      %s164 = sphi 0, %s148
    $region4: #{tpu_custom_call.1} parent=1 // loop_header_branch
      %20 = sbr.rel (%p18) target = $region8
    $region5: #{tpu_custom_call.1} parent=1 // loop_body
      %s22 = ssub.s32 %s17, 1
      %s23 = ssub.s32 %s17, 2
      %s30 = sadd.s32 1, %s25
      %p31 = scmp.ge.s32.totalorder %s30, 1
      %s32 = scalar_select %p31, 0, %s30
      %s33 = sadd.s32 1, %s24
      %s34 = scalar_select %p31, %s33, %s24
      %p35 = scmp.ge.s32.totalorder %s34, 2
      %s36 = scalar_select %p35, 0, %s34
      %s38 = sadd.s32 %s37, 1
      %p41 = scmp.eq.s32.totalorder %s17, 1
      %p42 = scmp.ne.s32.totalorder %s37, %s39
      %p43 = scmp.eq.s32.totalorder %s17, 0
      %p44 = por %p42, %p43
      %p45 = scmp.ne.s32.totalorder %s37, %s39
      %p46 = scmp.eq.s32.totalorder %s22, 1
      %p47 = por %p45, %p46
      %p48 = scmp.ne.s32.totalorder %s39, %s40
      %p49 = scmp.eq.s32.totalorder %s22, 0
      %p50 = por %p48, %p49
      %p51 = scmp.ne.s32.totalorder %s39, %s40
      %p52 = scmp.eq.s32.totalorder %s23, 1
      %p53 = por %p51, %p52
      %p55 = scmp.ne.s32.totalorder %s40, %s54
      %p56 = scmp.eq.s32.totalorder %s23, 0
      %p57 = por %p55, %p56
      %s58 = ssub.s32 %s24, %s36
      %s59 = ssub.s32 %s25, %s32
      %s60 = sor.u32 %s58, %s59
      %p61 = scmp.eq.s32.totalorder %s60, 0
      %s63 = sadd.s32 %s62, 1
      %s64 = scalar_select %p61, %s62, %s63
      %p67 = pneg %p61
      %p68 = scmp.eq.s32.totalorder %s17, 1
      %p69 = por %p67, %p68
      %p70 = scmp.ne.s32.totalorder %s62, %s65
      %p71 = scmp.eq.s32.totalorder %s17, 0
      %p72 = por %p70, %p71
      %p73 = scmp.ne.s32.totalorder %s62, %s65
      %p74 = scmp.eq.s32.totalorder %s22, 1
      %p75 = por %p73, %p74
      %p76 = scmp.ne.s32.totalorder %s65, %s66
      %p77 = scmp.eq.s32.totalorder %s22, 0
      %p78 = por %p76, %p77
      %p79 = scmp.ne.s32.totalorder %s65, %s66
      %p80 = scmp.eq.s32.totalorder %s23, 1
      %p81 = por %p79, %p80
      %p83 = scmp.ne.s32.totalorder %s66, %s82
      %p84 = scmp.eq.s32.totalorder %s23, 0
      %p85 = por %p83, %p84
      %s86 = ssub.s32 %s24, %s36
      %p87 = scmp.eq.s32.totalorder %s86, 0
      %s89 = sadd.s32 %s88, 1
      %s90 = scalar_select %p87, %s88, %s89
      %p93 = pneg %p87
      %p94 = scmp.eq.s32.totalorder %s17, 1
      %p95 = por %p93, %p94
      %p96 = scmp.ne.s32.totalorder %s88, %s91
      %p97 = scmp.eq.s32.totalorder %s17, 0
      %p98 = por %p96, %p97
      %p99 = scmp.ne.s32.totalorder %s88, %s91
      %p100 = scmp.eq.s32.totalorder %s22, 1
      %p101 = por %p99, %p100
      %p102 = scmp.ne.s32.totalorder %s91, %s92
      %p103 = scmp.eq.s32.totalorder %s22, 0
      %p104 = por %p102, %p103
      %p105 = scmp.ne.s32.totalorder %s91, %s92
      %p106 = scmp.eq.s32.totalorder %s23, 1
      %p107 = por %p105, %p106
      %p109 = scmp.ne.s32.totalorder %s92, %s108
      %p110 = scmp.eq.s32.totalorder %s23, 0
      %p111 = por %p109, %p110
      %s112 = ssub.s32 %s24, %s36
      %s113 = ssub.s32 %s25, %s32
      %s114 = sor.u32 %s112, %s113
      %p115 = scmp.eq.s32.totalorder %s114, 0
      %s117 = sadd.s32 %s116, 1
      %s118 = scalar_select %p115, %s116, %s117
      %p121 = pneg %p115
      %p122 = scmp.eq.s32.totalorder %s17, 1
      %p123 = por %p121, %p122
      %p124 = scmp.ne.s32.totalorder %s116, %s119
      %p125 = scmp.eq.s32.totalorder %s17, 0
      %p126 = por %p124, %p125
      %p127 = scmp.ne.s32.totalorder %s116, %s119
      %p128 = scmp.eq.s32.totalorder %s22, 1
      %p129 = por %p127, %p128
      %p130 = scmp.ne.s32.totalorder %s119, %s120
      %p131 = scmp.eq.s32.totalorder %s22, 0
      %p132 = por %p130, %p131
      %p133 = scmp.ne.s32.totalorder %s119, %s120
      %p134 = scmp.eq.s32.totalorder %s23, 1
      %p135 = por %p133, %p134
      %p137 = scmp.ne.s32.totalorder %s120, %s136
      %p138 = scmp.eq.s32.totalorder %s23, 0
      %p139 = por %p137, %p138
      %s140 = ssub.s32 %s24, %s36
      %s141 = ssub.s32 %s25, %s32
      %s142 = sor.u32 %s140, %s141
      %p143 = scmp.eq.s32.totalorder %s142, 0
      %s145 = sadd.s32 %s144, 1
      %s146 = scalar_select %p143, %s144, %s145
      %p149 = pneg %p143
      %p150 = scmp.eq.s32.totalorder %s17, 1
      %p151 = por %p149, %p150
      %p152 = scmp.ne.s32.totalorder %s144, %s147
      %p153 = scmp.eq.s32.totalorder %s17, 0
      %p154 = por %p152, %p153
      %p155 = scmp.ne.s32.totalorder %s144, %s147
      %p156 = scmp.eq.s32.totalorder %s22, 1
      %p157 = por %p155, %p156
      %p158 = scmp.ne.s32.totalorder %s147, %s148
      %p159 = scmp.eq.s32.totalorder %s22, 0
      %p160 = por %p158, %p159
      %p161 = scmp.ne.s32.totalorder %s147, %s148
      %p162 = scmp.eq.s32.totalorder %s23, 1
      %p163 = por %p161, %p162
      %p165 = scmp.ne.s32.totalorder %s148, %s164
      %p166 = scmp.eq.s32.totalorder %s23, 0
      %p167 = por %p165, %p166
      %p168 = scmp.le.s32.totalorder 1, %s17
      %p169 = scmp.lt.s32.totalorder %s17, 3
      %p170 = pnand %p168, %p169
      %p171 = pneg %p170
      // Predicated region
      $region9: #{tpu_custom_call.1} parent=5 // pred_check
        _
      $region10: #{tpu_custom_call.1} parent=5 // pred_check_branch
        %173 = sbr.rel (%p170) target = $region12
      $region11: #{tpu_custom_call.1} parent=5 // pred_region
        %s174 = ssub.s32 %s17, 1
        // Predicated region
        $region13: #{tpu_custom_call.1} parent=11 // pred_check
          %p175 = pneg %p50
        $region14: #{tpu_custom_call.1} parent=11 // pred_check_branch
          %177 = sbr.rel (%p175) target = $region16
        $region15: #{tpu_custom_call.1} parent=11 // pred_region
          _
        $region16: #{tpu_custom_call.1} parent=11 // pred_fallthru
          _
      $region12: #{tpu_custom_call.1} parent=5 // pred_fallthru
        _
      %p178 = scmp.lt.s32.totalorder %s17, 2
      // Predicated region
      $region17: #{tpu_custom_call.1} parent=5 // pred_check
        %p179 = pneg %p178
      $region18: #{tpu_custom_call.1} parent=5 // pred_check_branch
        %181 = sbr.rel (%p179) target = $region20
      $region19: #{tpu_custom_call.1} parent=5 // pred_region
        // Predicated region
        $region21: #{tpu_custom_call.1} parent=19 // pred_check
          %p182 = pneg %p72
        $region22: #{tpu_custom_call.1} parent=19 // pred_check_branch
          %184 = sbr.rel (%p182) target = $region24
        $region23: #{tpu_custom_call.1} parent=19 // pred_region
          %p185 = scmp.lt.s32.totalorder %s24, 1
          %s186 = scalar_select %p185, %s24, 1
          %p187 = scmp.lt.s32.totalorder %s25, 0
          %s188 = scalar_select %p187, %s25, 0
          %s189 = smul.addr %s186, 4
          %s190 = sadd.s32 %s188, %s189
          %s191 = smul.addr %s190, 8
          %s192 = scalar_lea.vmem %s1, %s191
        $region24: #{tpu_custom_call.1} parent=19 // pred_fallthru
          _
        // Predicated region
        $region25: #{tpu_custom_call.1} parent=19 // pred_check
          %p193 = pneg %p98
        $region26: #{tpu_custom_call.1} parent=19 // pred_check_branch
          %195 = sbr.rel (%p193) target = $region28
        $region27: #{tpu_custom_call.1} parent=19 // pred_region
          %p196 = scmp.lt.s32.totalorder %s24, 1
          %s197 = scalar_select %p196, %s24, 1
          %s198 = smul.addr %s197, 2
          %s199 = smul.addr %s198, 8
          %s200 = scalar_lea.vmem %s2, %s199
        $region28: #{tpu_custom_call.1} parent=19 // pred_fallthru
          _
      $region20: #{tpu_custom_call.1} parent=5 // pred_fallthru
        _
      %p201 = scmp.le.s32.totalorder 1, %s17
      %p202 = scmp.lt.s32.totalorder %s17, 3
      %p203 = pnand %p201, %p202
      %p204 = pneg %p203
      // Predicated region
      $region29: #{tpu_custom_call.1} parent=5 // pred_check
        _
      $region30: #{tpu_custom_call.1} parent=5 // pred_check_branch
        %206 = sbr.rel (%p203) target = $region32
      $region31: #{tpu_custom_call.1} parent=5 // pred_region
        %s207 = ssub.s32 %s17, 1
        %p208 = pneg %p50
        %p209 = pneg %p47
        %p210 = scmp.lt.s32.totalorder %s26, 1
        %s211 = scalar_select %p210, %s26, 1
        %p212 = scmp.lt.s32.totalorder %s27, 0
        %s213 = scalar_select %p212, %s27, 0
        %s214 = smul.addr %s211, 4
        %s215 = sadd.s32 %s213, %s214
        %s216 = smul.addr %s215, 8
        %s217 = scalar_lea.vmem %s1, %s216
        %p218 = pneg %p78
        %p219 = pneg %p75
        %p220 = scmp.lt.s32.totalorder %s26, 1
        %s221 = scalar_select %p220, %s26, 1
        %s222 = smul.addr %s221, 2
        %s223 = smul.addr %s222, 8
        %s224 = scalar_lea.vmem %s2, %s223
        %p225 = pneg %p104
        %p226 = pneg %p101
        %p227 = pneg %p132
        %p228 = pneg %p129
        %s229 = sand.u32 %s119, 1
        %s230 = scalar_lea.sflag [#allocation3], %s229
        %s231 = sand.u32 %s119, 1
        %s232 = smul.addr %s231, 32
        %s233 = scalar_lea.vmem [#allocation2], %s232
        %p234 = pneg %p160
        %p235 = pneg %p157
        %s236 = sand.u32 %s147, 1
        %s237 = scalar_lea.sflag [#allocation5], %s236
        %s238 = sand.u32 %s147, 1
        %s239 = smul.addr %s238, 8
        %s240 = scalar_lea.vmem [#allocation4], %s239
        %p241 = scmp.lt.s32.totalorder %s26, 1
        %s242 = scalar_select %p241, %s26, 1
        %p243 = scmp.lt.s32.totalorder %s27, 0
        %s244 = scalar_select %p243, %s27, 0
        %s245 = smul.addr %s242, 4
        %s246 = sadd.s32 %s244, %s245
        %s247 = smul.addr %s246, 8
        %s248 = scalar_lea.vmem %s1, %s247
        %p249 = scmp.lt.s32.totalorder %s26, 1
        %s250 = scalar_select %p249, %s26, 1
        %s251 = smul.addr %s250, 2
        %s252 = smul.addr %s251, 8
        %s253 = scalar_lea.vmem %s2, %s252
        %v254 = vld [vmem:[%s0] sm:$0xff]
        %v255 = vld [vmem:[%s0 + $0x8] sm:$0xff]
        %v256 = vld [vmem:[%s0 + $0x10] sm:$0xff]
        %v257 = vld [vmem:[%s0 + $0x18] sm:$0xff]
        %v258 = vld [vmem:[%s253] sm:$0xff]
        %v259 = vld [vmem:[%s253 + $0x8] sm:$0xff]
        %v260 = vld [vmem:[%s248] sm:$0xff]
        %v261 = vld [vmem:[%s248 + $0x8] sm:$0xff]
        %v262 = vld [vmem:[%s248 + $0x10] sm:$0xff]
        %v263 = vld [vmem:[%s248 + $0x18] sm:$0xff]
        %vm264 = vcmask 130048
        %v266 = vsel %vm264, %v254, 0
        %v269 = vsel %vm264, %v255, 0
        %v272 = vsel %vm264, %v256, 0
        %v275 = vsel %vm264, %v257, 0
        %277 = vmatprep.subr.mxu0 0.0
        %278 = vmatpush1.msra.mxu0 0.0
        %279 = vmatprep.subr.mxu0 0.0
        %280 = vmatpush1.msra.mxu0 0.0
        %281 = vmatprep.subr.mxu0 0.0
        %282 = vmatpush1.msra.mxu0 0.0
        %283 = vmatprep.subr.mxu0 0.0
        %284 = vmatpush1.msra.mxu0 0.0
        %285 = vmatprep.subr.mxu0 0.0
        %286 = vmatpush1.msra.mxu0 0.0
        %287 = vmatprep.subr.mxu0 0.0
        %288 = vmatpush1.msra.mxu0 0.0
        %289 = vmatprep.subr.mxu0 0.0
        %290 = vmatpush1.msra.mxu0 0.0
        %291 = vmatprep.subr.mxu0 0.0
        %292 = vmatpush1.msra.mxu0 0.0
        %293 = vmatprep.subr.mxu0 0.0
        %294 = vmatpush1.msra.mxu0 0.0
        %295 = vmatprep.subr.mxu0 0.0
        %296 = vmatpush1.msra.mxu0 0.0
        %297 = vmatprep.subr.mxu0 0.0
        %298 = vmatpush1.msra.mxu0 0.0
        %299 = vmatprep.subr.mxu0 0.0
        %300 = vmatpush1.msra.mxu0 0.0
        %301 = vmatprep.subr.mxu0 0.0
        %302 = vmatpush1.msra.mxu0 0.0
        %303 = vmatprep.subr.mxu0 0.0
        %304 = vmatpush1.msra.mxu0 0.0
        %305 = vmatprep.subr.mxu0 0.0
        %306 = vmatpush1.msra.mxu0 %v259
        %307 = vmatprep.subr.mxu0 0.0
        %308 = vmatpush1.msra.mxu0 %v258
        %309 = vmatprep.subr.mxu0 0.0
        %310 = vmatpush2.msra.mxu0 0.0
        %311 = vmatprep.subr.mxu0 0.0
        %312 = vmatpush2.msra.mxu0 0.0
        %313 = vmatprep.subr.mxu0 0.0
        %314 = vmatpush2.msra.mxu0 0.0
        %315 = vmatprep.subr.mxu0 0.0
        %316 = vmatpush2.msra.mxu0 0.0
        %317 = vmatprep.subr.mxu0 0.0
        %318 = vmatpush2.msra.mxu0 0.0
        %319 = vmatprep.subr.mxu0 0.0
        %320 = vmatpush2.msra.mxu0 0.0
        %321 = vmatprep.subr.mxu0 0.0
        %322 = vmatpush2.msra.mxu0 0.0
        %323 = vmatprep.subr.mxu0 0.0
        %324 = vmatpush2.msra.mxu0 0.0
        %325 = vmatprep.subr.mxu0 0.0
        %326 = vmatpush2.msra.mxu0 0.0
        %327 = vmatprep.subr.mxu0 0.0
        %328 = vmatpush2.msra.mxu0 0.0
        %329 = vmatprep.subr.mxu0 0.0
        %330 = vmatpush2.msra.mxu0 0.0
        %331 = vmatprep.subr.mxu0 0.0
        %332 = vmatpush2.msra.mxu0 0.0
        %333 = vmatprep.subr.mxu0 0.0
        %334 = vmatpush2.msra.mxu0 0.0
        %335 = vmatprep.subr.mxu0 0.0
        %336 = vmatpush2.msra.mxu0 0.0
        %337 = vmatprep.subr.mxu0 0.0
        %338 = vmatpush2.msra.mxu0 0.0
        %339 = vmatprep.subr.mxu0 0.0
        %340 = vmatpush2.msra.mxu0 0.0
        %341 = vmatprep.mubr.f32.mxu0 0.0
        %342 = vmatmul.mubr.f32.gmra.mxu0 %v266
        %v343 = vpop.f32.mrf.mxu0
        %v344 = vadd.f32 0.0, %v343
        %v345 = vpop.f32.mrf.mxu0
        %346 = vmatprep.mubr.f32.mxu0 0.0
        %347 = vmatmul.mubr.f32.gmra.mxu0 %v269
        %v348 = vpop.f32.mrf.mxu0
        %v349 = vadd.f32 0.0, %v348
        %v350 = vpop.f32.mrf.mxu0
        %351 = vmatprep.mubr.f32.mxu0 0.0
        %352 = vmatmul.mubr.f32.gmra.mxu0 %v272
        %v353 = vpop.f32.mrf.mxu0
        %v354 = vadd.f32 0.0, %v353
        %v355 = vpop.f32.mrf.mxu0
        %356 = vmatprep.mubr.f32.mxu0 0.0
        %357 = vmatmul.mubr.f32.gmra.mxu0 %v275
        %v358 = vpop.f32.mrf.mxu0
        %v359 = vadd.f32 0.0, %v358
        %v360 = vpop.f32.mrf.mxu0
        %361 = vdwg.mxu0
        %362 = vxpose.xlu0.b32.start [1/16] %v344, 128
        %363 = vxpose.xlu0.b32.cont [2/16] %v349, 128
        %364 = vxpose.xlu0.b32.cont [3/16] %v354, 128
        %365 = vxpose.xlu0.b32.cont [4/16] %v359, 128
        %366 = vxpose.xlu0.b32.cont [5/16] 0.0, 128
        %367 = vxpose.xlu0.b32.cont [6/16] 0.0, 128
        %368 = vxpose.xlu0.b32.cont [7/16] 0.0, 128
        %369 = vxpose.xlu0.b32.cont [8/16] 0.0, 128
        %370 = vxpose.xlu0.b32.cont [9/16] 0.0, 128
        %371 = vxpose.xlu0.b32.cont [10/16] 0.0, 128
        %372 = vxpose.xlu0.b32.cont [11/16] 0.0, 128
        %373 = vxpose.xlu0.b32.cont [12/16] 0.0, 128
        %374 = vxpose.xlu0.b32.cont [13/16] 0.0, 128
        %375 = vxpose.xlu0.b32.cont [14/16] 0.0, 128
        %376 = vxpose.xlu0.b32.cont [15/16] 0.0, 128
        %377 = vxpose.xlu0.b32.end [16/16] 0.0, 128
        %v378 = vpop.trf.xlu0
        %v379 = vpop.trf.xlu0
        %v380 = vpop.trf.xlu0
        %v381 = vpop.trf.xlu0
        %v382 = vpop.trf.xlu0
        %v383 = vpop.trf.xlu0
        %v384 = vpop.trf.xlu0
        %v385 = vpop.trf.xlu0
        %v386 = vpop.trf.xlu0
        %v387 = vpop.trf.xlu0
        %v388 = vpop.trf.xlu0
        %v389 = vpop.trf.xlu0
        %v390 = vpop.trf.xlu0
        %v391 = vpop.trf.xlu0
        %v392 = vpop.trf.xlu0
        %v393 = vpop.trf.xlu0
        %vm394 = vcmask 261120
        %v396 = vsel %vm394, %v378, 0
        %398 = vmatprep.subr.mxu0 0.0
        %399 = vmatpush1.msra.mxu0 0.0
        %400 = vmatprep.subr.mxu0 0.0
        %401 = vmatpush1.msra.mxu0 0.0
        %402 = vmatprep.subr.mxu0 0.0
        %403 = vmatpush1.msra.mxu0 0.0
        %404 = vmatprep.subr.mxu0 0.0
        %405 = vmatpush1.msra.mxu0 0.0
        %406 = vmatprep.subr.mxu0 0.0
        %407 = vmatpush1.msra.mxu0 0.0
        %408 = vmatprep.subr.mxu0 0.0
        %409 = vmatpush1.msra.mxu0 0.0
        %410 = vmatprep.subr.mxu0 0.0
        %411 = vmatpush1.msra.mxu0 0.0
        %412 = vmatprep.subr.mxu0 0.0
        %413 = vmatpush1.msra.mxu0 0.0
        %414 = vmatprep.subr.mxu0 0.0
        %415 = vmatpush1.msra.mxu0 0.0
        %416 = vmatprep.subr.mxu0 0.0
        %417 = vmatpush1.msra.mxu0 0.0
        %418 = vmatprep.subr.mxu0 0.0
        %419 = vmatpush1.msra.mxu0 0.0
        %420 = vmatprep.subr.mxu0 0.0
        %421 = vmatpush1.msra.mxu0 0.0
        %422 = vmatprep.subr.mxu0 0.0
        %423 = vmatpush1.msra.mxu0 %v263
        %424 = vmatprep.subr.mxu0 0.0
        %425 = vmatpush1.msra.mxu0 %v262
        %426 = vmatprep.subr.mxu0 0.0
        %427 = vmatpush1.msra.mxu0 %v261
        %428 = vmatprep.subr.mxu0 0.0
        %429 = vmatpush1.msra.mxu0 %v260
        %430 = vmatprep.subr.mxu0 0.0
        %431 = vmatpush2.msra.mxu0 0.0
        %432 = vmatprep.subr.mxu0 0.0
        %433 = vmatpush2.msra.mxu0 0.0
        %434 = vmatprep.subr.mxu0 0.0
        %435 = vmatpush2.msra.mxu0 0.0
        %436 = vmatprep.subr.mxu0 0.0
        %437 = vmatpush2.msra.mxu0 0.0
        %438 = vmatprep.subr.mxu0 0.0
        %439 = vmatpush2.msra.mxu0 0.0
        %440 = vmatprep.subr.mxu0 0.0
        %441 = vmatpush2.msra.mxu0 0.0
        %442 = vmatprep.subr.mxu0 0.0
        %443 = vmatpush2.msra.mxu0 0.0
        %444 = vmatprep.subr.mxu0 0.0
        %445 = vmatpush2.msra.mxu0 0.0
        %446 = vmatprep.subr.mxu0 0.0
        %447 = vmatpush2.msra.mxu0 0.0
        %448 = vmatprep.subr.mxu0 0.0
        %449 = vmatpush2.msra.mxu0 0.0
        %450 = vmatprep.subr.mxu0 0.0
        %451 = vmatpush2.msra.mxu0 0.0
        %452 = vmatprep.subr.mxu0 0.0
        %453 = vmatpush2.msra.mxu0 0.0
        %454 = vmatprep.subr.mxu0 0.0
        %455 = vmatpush2.msra.mxu0 0.0
        %456 = vmatprep.subr.mxu0 0.0
        %457 = vmatpush2.msra.mxu0 0.0
        %458 = vmatprep.subr.mxu0 0.0
        %459 = vmatpush2.msra.mxu0 0.0
        %460 = vmatprep.subr.mxu0 0.0
        %461 = vmatpush2.msra.mxu0 0.0
        %462 = vmatprep.mubr.f32.mxu0 0.0
        %463 = vmatmul.mubr.f32.gmra.mxu0 %v396
        %v464 = vpop.f32.mrf.mxu0
        %v465 = vadd.f32 0.0, %v464
        %v466 = vpop.f32.mrf.mxu0
        %467 = vdwg.mxu0
        %v468 = vrot.slane %v465, 4
        %v469 = vmax.f32 %v465, %v468
        %v470 = vrot.slane %v469, 2
        %v471 = vmax.f32 %v469, %v470
        %v472 = vrot.slane %v471, 1
        %v473 = vmax.f32 %v471, %v472
        %v474 = vsub.f32 %v465, %v473
        %v475 = vmul.f32 %v474, 1.442695
        %v476 = vpow.pop %v475
        %v477 = vrot.slane %v476, 4
        %v478 = vadd.f32 %v476, %v477
        %v479 = vrot.slane %v478, 2
        %v480 = vadd.f32 %v478, %v479
        %v481 = vrot.slane %v480, 1
        %v482 = vadd.f32 %v480, %v481
        %v483 = vrcp.pop %v482
        %v484 = vmul.f32 %v476, %v483
        %485 = vst [vmem:[%s240] sm:$0xff] %v484
        %vm486 = vcmask 64512
        %v488 = vsel %vm486, %v344, 0
        %v491 = vsel %vm486, %v349, 0
        %v494 = vsel %vm486, %v354, 0
        %v497 = vsel %vm486, %v359, 0
        %499 = vmatprep.subr.mxu0 0.0
        %500 = vmatpush1.msra.mxu0 0.0
        %501 = vmatprep.subr.mxu0 0.0
        %502 = vmatpush1.msra.mxu0 0.0
        %503 = vmatprep.subr.mxu0 0.0
        %504 = vmatpush1.msra.mxu0 0.0
        %505 = vmatprep.subr.mxu0 0.0
        %506 = vmatpush1.msra.mxu0 0.0
        %507 = vmatprep.subr.mxu0 0.0
        %508 = vmatpush1.msra.mxu0 0.0
        %509 = vmatprep.subr.mxu0 0.0
        %510 = vmatpush1.msra.mxu0 0.0
        %511 = vmatprep.subr.mxu0 0.0
        %512 = vmatpush1.msra.mxu0 0.0
        %513 = vmatprep.subr.mxu0 0.0
        %514 = vmatpush1.msra.mxu0 0.0
        %515 = vmatprep.subr.mxu0 0.0
        %516 = vmatpush1.msra.mxu0 0.0
        %517 = vmatprep.subr.mxu0 0.0
        %518 = vmatpush1.msra.mxu0 0.0
        %519 = vmatprep.subr.mxu0 0.0
        %520 = vmatpush1.msra.mxu0 0.0
        %521 = vmatprep.subr.mxu0 0.0
        %522 = vmatpush1.msra.mxu0 0.0
        %523 = vmatprep.subr.mxu0 0.0
        %524 = vmatpush1.msra.mxu0 0.0
        %525 = vmatprep.subr.mxu0 0.0
        %526 = vmatpush1.msra.mxu0 0.0
        %527 = vmatprep.subr.mxu0 0.0
        %528 = vmatpush1.msra.mxu0 0.0
        %529 = vmatprep.subr.mxu0 0.0
        %530 = vmatpush1.msra.mxu0 %v484
        %531 = vmatprep.subr.mxu0 0.0
        %532 = vmatpush2.msra.mxu0 0.0
        %533 = vmatprep.subr.mxu0 0.0
        %534 = vmatpush2.msra.mxu0 0.0
        %535 = vmatprep.subr.mxu0 0.0
        %536 = vmatpush2.msra.mxu0 0.0
        %537 = vmatprep.subr.mxu0 0.0
        %538 = vmatpush2.msra.mxu0 0.0
        %539 = vmatprep.subr.mxu0 0.0
        %540 = vmatpush2.msra.mxu0 0.0
        %541 = vmatprep.subr.mxu0 0.0
        %542 = vmatpush2.msra.mxu0 0.0
        %543 = vmatprep.subr.mxu0 0.0
        %544 = vmatpush2.msra.mxu0 0.0
        %545 = vmatprep.subr.mxu0 0.0
        %546 = vmatpush2.msra.mxu0 0.0
        %547 = vmatprep.subr.mxu0 0.0
        %548 = vmatpush2.msra.mxu0 0.0
        %549 = vmatprep.subr.mxu0 0.0
        %550 = vmatpush2.msra.mxu0 0.0
        %551 = vmatprep.subr.mxu0 0.0
        %552 = vmatpush2.msra.mxu0 0.0
        %553 = vmatprep.subr.mxu0 0.0
        %554 = vmatpush2.msra.mxu0 0.0
        %555 = vmatprep.subr.mxu0 0.0
        %556 = vmatpush2.msra.mxu0 0.0
        %557 = vmatprep.subr.mxu0 0.0
        %558 = vmatpush2.msra.mxu0 0.0
        %559 = vmatprep.subr.mxu0 0.0
        %560 = vmatpush2.msra.mxu0 0.0
        %561 = vmatprep.subr.mxu0 0.0
        %562 = vmatpush2.msra.mxu0 0.0
        %563 = vmatprep.mubr.f32.mxu0 0.0
        %564 = vmatmul.mubr.f32.gmra.mxu0 %v488
        %v565 = vpop.f32.mrf.mxu0
        %v566 = vadd.f32 0.0, %v565
        %v567 = vpop.f32.mrf.mxu0
        %568 = vmatprep.mubr.f32.mxu0 0.0
        %569 = vmatmul.mubr.f32.gmra.mxu0 %v491
        %v570 = vpop.f32.mrf.mxu0
        %v571 = vadd.f32 0.0, %v570
        %v572 = vpop.f32.mrf.mxu0
        %573 = vmatprep.mubr.f32.mxu0 0.0
        %574 = vmatmul.mubr.f32.gmra.mxu0 %v494
        %v575 = vpop.f32.mrf.mxu0
        %v576 = vadd.f32 0.0, %v575
        %v577 = vpop.f32.mrf.mxu0
        %578 = vmatprep.mubr.f32.mxu0 0.0
        %579 = vmatmul.mubr.f32.gmra.mxu0 %v497
        %v580 = vpop.f32.mrf.mxu0
        %v581 = vadd.f32 0.0, %v580
        %v582 = vpop.f32.mrf.mxu0
        %583 = vdwg.mxu0
        %584 = vst [vmem:[%s233] sm:$0xff] %v566
        %585 = vst [vmem:[%s233 + $0x8] sm:$0xff] %v571
        %586 = vst [vmem:[%s233 + $0x10] sm:$0xff] %v576
        %587 = vst [vmem:[%s233 + $0x18] sm:$0xff] %v581
        %s588 = sand.u32 %s119, 1
        %s589 = scalar_lea.sflag [#allocation3], %s588
        %s590 = sand.u32 %s119, 1
        %s591 = smul.addr %s590, 32
        %s592 = scalar_lea.vmem [#allocation2], %s591
        %s593 = sand.u32 %s147, 1
        %s594 = scalar_lea.sflag [#allocation5], %s593
        %s595 = sand.u32 %s147, 1
        %s596 = smul.addr %s595, 8
        %s597 = scalar_lea.vmem [#allocation4], %s596
        // Predicated region
        $region33: #{tpu_custom_call.1} parent=31 // pred_check
          %p598 = pneg %p129
        $region34: #{tpu_custom_call.1} parent=31 // pred_check_branch
          %600 = sbr.rel (%p598) target = $region36
        $region35: #{tpu_custom_call.1} parent=31 // pred_region
          %s602 = ssub.s32 512, 512
          %603 = vsyncadd %s589, %s602
          %s604 = smul.addr %s26, 4
          %s605 = sadd.s32 %s27, %s604
          %s606 = smul.addr %s605, 128
          %s607 = scalar_lea.hbm %s3, %s606
          %s608 = sshll.u32 %s592, 4
          %s609 = int_to_ptr.vmem [resolvable:$true] %s608
          %614 = dma.vmem_to_hbm [thread:$0]  %s609, 512, %s607, %s589, 128, 128, 8
        $region36: #{tpu_custom_call.1} parent=31 // pred_fallthru
          _
        // Predicated region
        $region37: #{tpu_custom_call.1} parent=31 // pred_check
          %p615 = pneg %p157
        $region38: #{tpu_custom_call.1} parent=31 // pred_check_branch
          %617 = sbr.rel (%p615) target = $region40
        $region39: #{tpu_custom_call.1} parent=31 // pred_region
          %s619 = ssub.s32 128, 128
          %620 = vsyncadd %s594, %s619
          %s621 = sadd.s32 %s27, %s26
          %s622 = smul.addr %s621, 128
          %s623 = scalar_lea.hbm %s4, %s622
          %s625 = sshll.u32 %s597, 4
          %s626 = int_to_ptr.vmem [resolvable:$true] %s625
          %628 = dma.vmem_to_hbm [thread:$0]  %s626, 128, %s623, %s594
        $region40: #{tpu_custom_call.1} parent=31 // pred_fallthru
          _
      $region32: #{tpu_custom_call.1} parent=5 // pred_fallthru
        _
      %p629 = scmp.le.s32.totalorder 2, %s17
      // Predicated region
      $region41: #{tpu_custom_call.1} parent=5 // pred_check
        %p630 = pneg %p629
      $region42: #{tpu_custom_call.1} parent=5 // pred_check_branch
        %632 = sbr.rel (%p630) target = $region44
      $region43: #{tpu_custom_call.1} parent=5 // pred_region
        %s633 = ssub.s32 %s17, 2
        // Predicated region
        $region45: #{tpu_custom_call.1} parent=43 // pred_check
          %p634 = pneg %p135
        $region46: #{tpu_custom_call.1} parent=43 // pred_check_branch
          %636 = sbr.rel (%p634) target = $region48
        $region47: #{tpu_custom_call.1} parent=43 // pred_region
          %s637 = sand.u32 %s120, 1
          %s638 = scalar_lea.sflag [#allocation3], %s637
          %s639 = sand.u32 %s120, 1
          %s640 = smul.addr %s639, 32
          %s641 = scalar_lea.vmem [#allocation2], %s640
          %642 = dma.done %s638, 512
        $region48: #{tpu_custom_call.1} parent=43 // pred_fallthru
          _
        // Predicated region
        $region49: #{tpu_custom_call.1} parent=43 // pred_check
          %p643 = pneg %p163
        $region50: #{tpu_custom_call.1} parent=43 // pred_check_branch
          %645 = sbr.rel (%p643) target = $region52
        $region51: #{tpu_custom_call.1} parent=43 // pred_region
          %s646 = sand.u32 %s148, 1
          %s647 = scalar_lea.sflag [#allocation5], %s646
          %s648 = sand.u32 %s148, 1
          %s649 = smul.addr %s648, 8
          %s650 = scalar_lea.vmem [#allocation4], %s649
          %651 = dma.done %s647, 128
        $region52: #{tpu_custom_call.1} parent=43 // pred_fallthru
          _
      $region44: #{tpu_custom_call.1} parent=5 // pred_fallthru
        _
    $region6: #{tpu_custom_call.1} parent=1 // loop_footer
      %s21 = sadd.s32 1, %s17
    $region7: #{tpu_custom_call.1} parent=1 // loop_footer_branch
      %16 = sbr.rel target = $region3
    $region8: #{tpu_custom_call.1} parent=1 // loop_exit
      _
    %652 = vsyncpa [#allocation3], 1
    %s653 = scalar_lea.sflag [#allocation3], 1
    %654 = vsyncpa %s653, 1
    %655 = vsyncpa [#allocation5], 1
    %s656 = scalar_lea.sflag [#allocation5], 1
    %657 = vsyncpa %s656, 1

</llo_original>
